<compile_context>
chip_gen: v5e
topology: v5e:2x2
jax: 0.10.0
libtpu: 0.0.40
codegen_flags: <defaults>
</compile_context>

<pallas_src>
import jax
import jax.numpy as jnp
from jax.experimental import pallas as pl
from jax.experimental.pallas import tpu as pltpu

LANE = 128  # TPU lane width / MXU-friendly feature padding


def mlp_kernel(x_ref, w_ref, b_ref, o_ref):
    # x_ref: (TB, 128)   w_ref: (3, 128, 128)   b_ref: (3, 128)   o_ref: (TB, 128)
    # hidden layer 1: Linear + ReLU
    h = jnp.dot(x_ref[...], w_ref[0], preferred_element_type=jnp.float32)
    h = jnp.maximum(h + b_ref[0:1, :], 0.0)
    # hidden layer 2: Linear + ReLU
    h = jnp.dot(h, w_ref[1], preferred_element_type=jnp.float32)
    h = jnp.maximum(h + b_ref[1:2, :], 0.0)
    # output layer: Linear (no activation); lane-dense store
    o = jnp.dot(h, w_ref[2], preferred_element_type=jnp.float32)
    o_ref[...] = (o + b_ref[2:3, :]).astype(o_ref.dtype)


def _pad2(a, rows, cols):
    r, c = a.shape
    return jnp.pad(a, ((0, rows - r), (0, cols - c)))


def mlp_forward(x, w1, b1, w2, b2, w3, b3, *, block_b=256):
    """x: [B, 2]; weights stored [in, out]; biases [1, out]. Returns [B, 1]."""
    B = x.shape[0]
    out_dim = w3.shape[1]

    # Batch tile: multiple of 8 (sublane), capped at block_b (256 fills the
    # v6e/v7x MXU; still fine on v5e). Batch is zero-padded to a multiple of TB.
    TB = min(block_b, pl.cdiv(B, 8) * 8)
    B_pad = pl.cdiv(B, TB) * TB

    # Wrapper-side padding to lane-dense shapes.
    x_p = _pad2(x.astype(jnp.float32), B_pad, LANE)                  # [B_pad, 128]
    w_p = jnp.stack([_pad2(w1, LANE, LANE),
                     _pad2(w2, LANE, LANE),
                     _pad2(w3, LANE, LANE)], axis=0)                 # [3, 128, 128]
    b_p = jnp.concatenate([_pad2(b1, 1, LANE),
                           _pad2(b2, 1, LANE),
                           _pad2(b3, 1, LANE)], axis=0)              # [3, 128]

    out_padded = pl.pallas_call(
        mlp_kernel,
        out_shape=jax.ShapeDtypeStruct((B_pad, LANE), jnp.float32),
        grid_spec=pltpu.PrefetchScalarGridSpec(
            num_scalar_prefetch=0,
            grid=(B_pad // TB,),
            in_specs=[
                pl.BlockSpec((TB, LANE), lambda i: (i, 0)),          # x tile
                pl.BlockSpec((3, LANE, LANE), lambda i: (0, 0, 0)),  # packed weights (resident)
                pl.BlockSpec((3, LANE), lambda i: (0, 0)),           # packed biases (resident)
            ],
            out_specs=pl.BlockSpec((TB, LANE), lambda i: (i, 0)),
        ),
        compiler_params=pltpu.CompilerParams(
            dimension_semantics=("parallel",)),
    )(x_p, w_p, b_p)

    # Slice the lane-dense slab back to the true output shape.
    return out_padded[:B, :out_dim]


def init_linear(key, in_features, out_features):
    # mimic nn.Linear default init (uniform(-1/sqrt(in), 1/sqrt(in))),
    # deterministic via PRNGKey; weight stored as [in, out].
    kw, kb = jax.random.split(key)
    bound = 1.0 / (in_features ** 0.5)
    w = jax.random.uniform(kw, (in_features, out_features), jnp.float32,
                           minval=-bound, maxval=bound)
    b = jax.random.uniform(kb, (1, out_features), jnp.float32,
                           minval=-bound, maxval=bound)
    return w, b


if __name__ == "__main__":
    key = jax.random.PRNGKey(0)
    k_x, k1, k2, k3 = jax.random.split(key, 4)

    B = 8
    x = jax.random.normal(k_x, (B, 2), jnp.float32)

    w1, b1 = init_linear(k1, 2, 5)
    w2, b2 = init_linear(k2, 5, 5)
    w3, b3 = init_linear(k3, 5, 1)

    out = mlp_forward(x, w1, b1, w2, b2, w3, b3)
    jax.block_until_ready(out)

    # correctness check against plain-JAX reference
    h_ref = jnp.maximum(x @ w1 + b1, 0.0)
    h_ref = jnp.maximum(h_ref @ w2 + b2, 0.0)
    ref = h_ref @ w3 + b3
    assert out.shape == (B, 1)
    assert jnp.allclose(out, ref, atol=1e-5), "mismatch vs reference"

    print("KERNEL_OK")
</pallas_src>

<mosaic_0001>
module attributes {stable_mosaic.version = 11 : i64} {
  func.func @mlp_kernel(%arg0: i32, %arg1: memref<8x128xf32, #tpu.memory_space<vmem>>, %arg2: memref<3x128x128xf32, #tpu.memory_space<vmem>>, %arg3: memref<3x128xf32, #tpu.memory_space<vmem>>, %arg4: memref<8x128xf32, #tpu.memory_space<vmem>>) attributes {dimension_semantics = [#tpu.dimension_semantics<parallel>], iteration_bounds = array<i64: 1>, scalar_prefetch = 0 : i64, scratch_operands = 0 : i64, tpu.core_type = #tpu.core_type<tc>, window_params = [{transform_indices = @transform_0, window_bounds = array<i64: 8, 128>}, {pipeline_mode = #tpu.pipeline_mode<synchronous>, transform_indices = @transform_1, window_bounds = array<i64: 3, 128, 128>}, {pipeline_mode = #tpu.pipeline_mode<synchronous>, transform_indices = @transform_2, window_bounds = array<i64: 3, 128>}, {transform_indices = @transform_3, window_bounds = array<i64: 8, 128>}]} {
    %c0 = arith.constant 0 : index
    %c0_0 = arith.constant 0 : index
    %0 = vector.load %arg1[%c0, %c0_0] : memref<8x128xf32, #tpu.memory_space<vmem>>, vector<8x128xf32>
    %c0_1 = arith.constant 0 : index
    %c0_2 = arith.constant 0 : index
    %c0_3 = arith.constant 0 : index
    %1 = vector.load %arg2[%c0_1, %c0_2, %c0_3] : memref<3x128x128xf32, #tpu.memory_space<vmem>>, vector<1x128x128xf32>
    %2 = vector.shape_cast %1 : vector<1x128x128xf32> to vector<128x128xf32>
    %cst = arith.constant dense<0.000000e+00> : vector<8x128xf32>
    %3 = tpu.matmul %0, %2, %cst {dimension_numbers = #tpu.dot_dimension_numbers<[1], [0], [0], [1], [0, 0, 1, 1], [], []>} : vector<8x128xf32>, vector<128x128xf32>, vector<8x128xf32> -> vector<8x128xf32>
    %c0_4 = arith.constant 0 : index
    %c0_5 = arith.constant 0 : index
    %4 = vector.load %arg3[%c0_4, %c0_5] : memref<3x128xf32, #tpu.memory_space<vmem>>, vector<1x128xf32>
    %5 = vector.broadcast %4 : vector<1x128xf32> to vector<8x128xf32>
    %6 = arith.addf %3, %5 : vector<8x128xf32>
    %cst_6 = arith.constant 0.000000e+00 : f32
    %7 = vector.broadcast %cst_6 : f32 to vector<8x128xf32>
    %8 = arith.maximumf %6, %7 : vector<8x128xf32>
    %c1 = arith.constant 1 : index
    %c0_7 = arith.constant 0 : index
    %c0_8 = arith.constant 0 : index
    %9 = vector.load %arg2[%c1, %c0_7, %c0_8] : memref<3x128x128xf32, #tpu.memory_space<vmem>>, vector<1x128x128xf32>
    %10 = vector.shape_cast %9 : vector<1x128x128xf32> to vector<128x128xf32>
    %cst_9 = arith.constant dense<0.000000e+00> : vector<8x128xf32>
    %11 = tpu.matmul %8, %10, %cst_9 {dimension_numbers = #tpu.dot_dimension_numbers<[1], [0], [0], [1], [0, 0, 1, 1], [], []>} : vector<8x128xf32>, vector<128x128xf32>, vector<8x128xf32> -> vector<8x128xf32>
    %c1_10 = arith.constant 1 : index
    %c0_11 = arith.constant 0 : index
    %12 = vector.load %arg3[%c1_10, %c0_11] : memref<3x128xf32, #tpu.memory_space<vmem>>, vector<1x128xf32>
    %13 = vector.broadcast %12 : vector<1x128xf32> to vector<8x128xf32>
    %14 = arith.addf %11, %13 : vector<8x128xf32>
    %cst_12 = arith.constant 0.000000e+00 : f32
    %15 = vector.broadcast %cst_12 : f32 to vector<8x128xf32>
    %16 = arith.maximumf %14, %15 : vector<8x128xf32>
    %c2 = arith.constant 2 : index
    %c0_13 = arith.constant 0 : index
    %c0_14 = arith.constant 0 : index
    %17 = vector.load %arg2[%c2, %c0_13, %c0_14] : memref<3x128x128xf32, #tpu.memory_space<vmem>>, vector<1x128x128xf32>
    %18 = vector.shape_cast %17 : vector<1x128x128xf32> to vector<128x128xf32>
    %cst_15 = arith.constant dense<0.000000e+00> : vector<8x128xf32>
    %19 = tpu.matmul %16, %18, %cst_15 {dimension_numbers = #tpu.dot_dimension_numbers<[1], [0], [0], [1], [0, 0, 1, 1], [], []>} : vector<8x128xf32>, vector<128x128xf32>, vector<8x128xf32> -> vector<8x128xf32>
    %c2_16 = arith.constant 2 : index
    %c0_17 = arith.constant 0 : index
    %20 = vector.load %arg3[%c2_16, %c0_17] : memref<3x128xf32, #tpu.memory_space<vmem>>, vector<1x128xf32>
    %21 = vector.broadcast %20 : vector<1x128xf32> to vector<8x128xf32>
    %22 = arith.addf %19, %21 : vector<8x128xf32>
    %c0_18 = arith.constant 0 : index
    %c0_19 = arith.constant 0 : index
    %23 = vector.load %arg4[%c0_18, %c0_19] : memref<8x128xf32, #tpu.memory_space<vmem>>, vector<8x128xf32>
    tpu.vector_store %arg4[%c0_18, %c0_19], %22 {strides = array<i32>} : memref<8x128xf32, #tpu.memory_space<vmem>>, vector<8x128xf32>,
    return
  }
  func.func @transform_0(%arg0: i32) -> (i32, i32) {
    %c0_i32 = arith.constant 0 : i32
    %c0_i32_0 = arith.constant 0 : i32
    return %arg0, %c0_i32 : i32, i32
  }
  func.func @transform_1(%arg0: i32) -> (i32, i32, i32) {
    %c0_i32 = arith.constant 0 : i32
    %c0_i32_0 = arith.constant 0 : i32
    %c0_i32_1 = arith.constant 0 : i32
    %c0_i32_2 = arith.constant 0 : i32
    return %c0_i32, %c0_i32_0, %c0_i32_1 : i32, i32, i32
  }
  func.func @transform_2(%arg0: i32) -> (i32, i32) {
    %c0_i32 = arith.constant 0 : i32
    %c0_i32_0 = arith.constant 0 : i32
    %c0_i32_1 = arith.constant 0 : i32
    return %c0_i32, %c0_i32_0 : i32, i32
  }
  func.func @transform_3(%arg0: i32) -> (i32, i32) {
    %c0_i32 = arith.constant 0 : i32
    %c0_i32_0 = arith.constant 0 : i32
    return %arg0, %c0_i32 : i32, i32
  }
}

</mosaic_0001>

<llo_original>
// kernel: tpu_custom_call.1
$region0: #{tpu_custom_call.1}
  #allocation0 [shape = 'u32[]', space=smem, size = 0x4, offset = 0x4, fixed_abs, tag = 'smem constant byte address 0x4 - core index']
  #allocation1 [shape = 'u32[72,128]{1,0:T(1,128)}', space=vmem, size = 0x9000, scoped, tag = 'internal scratch']
  %s0 = inlined_call_operand.hbm [shape: f32[8,128], index: 0, kind: input, shape index: {}]
  %s1 = inlined_call_operand.hbm [shape: f32[3,128,128], index: 1, kind: input, shape index: {}]
  %s2 = inlined_call_operand.hbm [shape: f32[3,128], index: 2, kind: input, shape index: {}]
  %s3 = inlined_call_operand.hbm [shape: f32[8,128], index: 3, kind: output, shape index: {}]
  %s4 = sld [smem:[#allocation0]]
  $region34: #{tpu_custom_call.1} parent=0
    _
  %s6 = ssub.s32 1, %s4
  %s7 = scalar_select 0, %s6, %s4
  $region1: #{tpu_custom_call.1} parent=0
    #allocation2 [shape = 'u8[4096]{0}', space=vmem, size = 0x1000, scoped, tag = 'input window, operand 0, single buffered']
    #allocation3 [shape = 's32[1]{0}', space=sflag, size = 0x4, scoped, tag = 'scoped memory for tpu_custom_call.1']
    #allocation4 [shape = 's32[1]{0}', space=sflag, size = 0x4, scoped, tag = 'scoped memory for tpu_custom_call.1']
    #allocation5 [shape = 'u8[196608]{0}', space=vmem, size = 0x30000, scoped, tag = 'input window, operand 1, single buffered']
    #allocation6 [shape = 's32[1]{0}', space=sflag, size = 0x4, scoped, tag = 'scoped memory for tpu_custom_call.1']
    #allocation7 [shape = 'u8[2048]{0}', space=vmem, size = 0x800, scoped, tag = 'input window, operand 2, single buffered']
    #allocation8 [shape = 'u8[4096]{0}', space=vmem, size = 0x1000, scoped, tag = 'output window, operand 0, single buffered']
    %8 = vsyncpa [#allocation3], 0
    %9 = vsyncpa [#allocation6], 0
    %10 = vsyncpa [#allocation4], 0
    // Predicated region
    $region2: #{tpu_custom_call.1} parent=1 // pred_check
      _
    $region3: #{tpu_custom_call.1} parent=1 // pred_check_branch
      %12 = sbr.rel (0) target = $region5
    $region4: #{tpu_custom_call.1} parent=1 // pred_region
      %14 = vsyncadd [#allocation3], 0
      %s16 = sshll.u32 %s0, 4
      %s17 = int_to_ptr.hbm [resolvable:$true] %s16
      %s18 = sshll.u32 [#allocation2], 4
      %s19 = int_to_ptr.vmem [resolvable:$true] %s18
      %21 = dma.hbm_to_vmem [thread:$0]  %s17, 128, %s19, [#allocation3]
    $region5: #{tpu_custom_call.1} parent=1 // pred_fallthru
      _
    // Predicated region
    $region6: #{tpu_custom_call.1} parent=1 // pred_check
      _
    $region7: #{tpu_custom_call.1} parent=1 // pred_check_branch
      %23 = sbr.rel (0) target = $region9
    $region8: #{tpu_custom_call.1} parent=1 // pred_region
      %25 = vsyncadd [#allocation6], 0
      %s26 = sshll.u32 %s1, 4
      %s27 = int_to_ptr.hbm [resolvable:$true] %s26
      %s28 = sshll.u32 [#allocation5], 4
      %s29 = int_to_ptr.vmem [resolvable:$true] %s28
      %34 = dma.hbm_to_vmem [thread:$0]  %s27, 6144, %s29, [#allocation6], 128, 128, 8
    $region9: #{tpu_custom_call.1} parent=1 // pred_fallthru
      _
    // Predicated region
    $region10: #{tpu_custom_call.1} parent=1 // pred_check
      _
    $region11: #{tpu_custom_call.1} parent=1 // pred_check_branch
      %36 = sbr.rel (0) target = $region13
    $region12: #{tpu_custom_call.1} parent=1 // pred_region
      %38 = vsyncadd [#allocation6], 0
      %s40 = sshll.u32 %s2, 4
      %s41 = int_to_ptr.hbm [resolvable:$true] %s40
      %s42 = sshll.u32 [#allocation7], 4
      %s43 = int_to_ptr.vmem [resolvable:$true] %s42
      %45 = dma.hbm_to_vmem [thread:$0]  %s41, 64, %s43, [#allocation6]
    $region13: #{tpu_custom_call.1} parent=1 // pred_fallthru
      _
    // Predicated region
    $region14: #{tpu_custom_call.1} parent=1 // pred_check
      _
    $region15: #{tpu_custom_call.1} parent=1 // pred_check_branch
      %47 = sbr.rel (0) target = $region17
    $region16: #{tpu_custom_call.1} parent=1 // pred_region
      %49 = dma.done [#allocation3], 128
    $region17: #{tpu_custom_call.1} parent=1 // pred_fallthru
      _
    // Predicated region
    $region18: #{tpu_custom_call.1} parent=1 // pred_check
      _
    $region19: #{tpu_custom_call.1} parent=1 // pred_check_branch
      %51 = sbr.rel (0) target = $region21
    $region20: #{tpu_custom_call.1} parent=1 // pred_region
      %53 = dma.done [#allocation6], 6144
    $region21: #{tpu_custom_call.1} parent=1 // pred_fallthru
      _
    // Predicated region
    $region22: #{tpu_custom_call.1} parent=1 // pred_check
      _
    $region23: #{tpu_custom_call.1} parent=1 // pred_check_branch
      %55 = sbr.rel (0) target = $region25
    $region24: #{tpu_custom_call.1} parent=1 // pred_region
      %57 = dma.done [#allocation6], 64
    $region25: #{tpu_custom_call.1} parent=1 // pred_fallthru
      _
    %v58 = vld [vmem:[#allocation2] sm:$0xff]
    %v59 = vld [vmem:[#allocation5] sm:$0xff]
    %v60 = vld [vmem:[#allocation5 + $0x8] sm:$0xff]
    %v61 = vld [vmem:[#allocation5 + $0x10] sm:$0xff]
    %v62 = vld [vmem:[#allocation5 + $0x18] sm:$0xff]
    %v63 = vld [vmem:[#allocation5 + $0x20] sm:$0xff]
    %v64 = vld [vmem:[#allocation5 + $0x28] sm:$0xff]
    %v65 = vld [vmem:[#allocation5 + $0x30] sm:$0xff]
    %v66 = vld [vmem:[#allocation5 + $0x38] sm:$0xff]
    %v67 = vld [vmem:[#allocation5 + $0x40] sm:$0xff]
    %v68 = vld [vmem:[#allocation5 + $0x48] sm:$0xff]
    %v69 = vld [vmem:[#allocation5 + $0x50] sm:$0xff]
    %v70 = vld [vmem:[#allocation5 + $0x58] sm:$0xff]
    %v71 = vld [vmem:[#allocation5 + $0x60] sm:$0xff]
    %v72 = vld [vmem:[#allocation5 + $0x68] sm:$0xff]
    %v73 = vld [vmem:[#allocation5 + $0x70] sm:$0xff]
    %v74 = vld [vmem:[#allocation5 + $0x78] sm:$0xff]
    %v75 = vld [vmem:[#allocation7] sm:$0x1]
    %v76 = vperm.slane %v75, 0
    %77 = vmatpush.msra.mxu0 %v74
    %78 = vmatpush.msra.mxu0 %v73
    %79 = vmatpush.msra.mxu0 %v72
    %80 = vmatpush.msra.mxu0 %v71
    %81 = vmatpush.msra.mxu0 %v70
    %82 = vmatpush.msra.mxu0 %v69
    %83 = vmatpush.msra.mxu0 %v68
    %84 = vmatpush.msra.mxu0 %v67
    %85 = vmatpush.msra.mxu0 %v66
    %86 = vmatpush.msra.mxu0 %v65
    %87 = vmatpush.msra.mxu0 %v64
    %88 = vmatpush.msra.mxu0 %v63
    %89 = vmatpush.msra.mxu0 %v62
    %90 = vmatpush.msra.mxu0 %v61
    %91 = vmatpush.msra.mxu0 %v60
    %92 = vmatpush.msra.mxu0 %v59
    %93 = vmatmul.f32.gmra.mxu0 %v58
    %v94 = vpop.f32.mrf.mxu0
    %v95 = vadd.f32 %v76, %v94
    %96 = vdwg.mxu0
    %v97 = vmax.f32 %v95, 0.0
    %s98 = scalar_lea.vmem [#allocation5], 128
    %v99 = vld [vmem:[%s98] sm:$0xff]
    %v100 = vld [vmem:[%s98 + $0x8] sm:$0xff]
    %v101 = vld [vmem:[%s98 + $0x10] sm:$0xff]
    %v102 = vld [vmem:[%s98 + $0x18] sm:$0xff]
    %v103 = vld [vmem:[%s98 + $0x20] sm:$0xff]
    %v104 = vld [vmem:[%s98 + $0x28] sm:$0xff]
    %v105 = vld [vmem:[%s98 + $0x30] sm:$0xff]
    %v106 = vld [vmem:[%s98 + $0x38] sm:$0xff]
    %v107 = vld [vmem:[%s98 + $0x40] sm:$0xff]
    %v108 = vld [vmem:[%s98 + $0x48] sm:$0xff]
    %v109 = vld [vmem:[%s98 + $0x50] sm:$0xff]
    %v110 = vld [vmem:[%s98 + $0x58] sm:$0xff]
    %v111 = vld [vmem:[%s98 + $0x60] sm:$0xff]
    %v112 = vld [vmem:[%s98 + $0x68] sm:$0xff]
    %v113 = vld [vmem:[%s98 + $0x70] sm:$0xff]
    %v114 = vld [vmem:[%s98 + $0x78] sm:$0xff]
    %v115 = vld [vmem:[#allocation7 + $0x1] sm:$0x1]
    %v116 = vperm.slane %v115, 0
    %117 = vmatpush.msra.mxu0 %v114
    %118 = vmatpush.msra.mxu0 %v113
    %119 = vmatpush.msra.mxu0 %v112
    %120 = vmatpush.msra.mxu0 %v111
    %121 = vmatpush.msra.mxu0 %v110
    %122 = vmatpush.msra.mxu0 %v109
    %123 = vmatpush.msra.mxu0 %v108
    %124 = vmatpush.msra.mxu0 %v107
    %125 = vmatpush.msra.mxu0 %v106
    %126 = vmatpush.msra.mxu0 %v105
    %127 = vmatpush.msra.mxu0 %v104
    %128 = vmatpush.msra.mxu0 %v103
    %129 = vmatpush.msra.mxu0 %v102
    %130 = vmatpush.msra.mxu0 %v101
    %131 = vmatpush.msra.mxu0 %v100
    %132 = vmatpush.msra.mxu0 %v99
    %133 = vmatmul.f32.gmra.mxu0 %v97
    %v134 = vpop.f32.mrf.mxu0
    %v135 = vadd.f32 %v116, %v134
    %136 = vdwg.mxu0
    %v137 = vmax.f32 %v135, 0.0
    %s138 = scalar_lea.vmem [#allocation5], 256
    %v139 = vld [vmem:[%s138] sm:$0xff]
    %v140 = vld [vmem:[%s138 + $0x8] sm:$0xff]
    %v141 = vld [vmem:[%s138 + $0x10] sm:$0xff]
    %v142 = vld [vmem:[%s138 + $0x18] sm:$0xff]
    %v143 = vld [vmem:[%s138 + $0x20] sm:$0xff]
    %v144 = vld [vmem:[%s138 + $0x28] sm:$0xff]
    %v145 = vld [vmem:[%s138 + $0x30] sm:$0xff]
    %v146 = vld [vmem:[%s138 + $0x38] sm:$0xff]
    %v147 = vld [vmem:[%s138 + $0x40] sm:$0xff]
    %v148 = vld [vmem:[%s138 + $0x48] sm:$0xff]
    %v149 = vld [vmem:[%s138 + $0x50] sm:$0xff]
    %v150 = vld [vmem:[%s138 + $0x58] sm:$0xff]
    %v151 = vld [vmem:[%s138 + $0x60] sm:$0xff]
    %v152 = vld [vmem:[%s138 + $0x68] sm:$0xff]
    %v153 = vld [vmem:[%s138 + $0x70] sm:$0xff]
    %v154 = vld [vmem:[%s138 + $0x78] sm:$0xff]
    %v155 = vld [vmem:[#allocation7 + $0x2] sm:$0x1]
    %v156 = vperm.slane %v155, 0
    %157 = vmatpush.msra.mxu0 %v154
    %158 = vmatpush.msra.mxu0 %v153
    %159 = vmatpush.msra.mxu0 %v152
    %160 = vmatpush.msra.mxu0 %v151
    %161 = vmatpush.msra.mxu0 %v150
    %162 = vmatpush.msra.mxu0 %v149
    %163 = vmatpush.msra.mxu0 %v148
    %164 = vmatpush.msra.mxu0 %v147
    %165 = vmatpush.msra.mxu0 %v146
    %166 = vmatpush.msra.mxu0 %v145
    %167 = vmatpush.msra.mxu0 %v144
    %168 = vmatpush.msra.mxu0 %v143
    %169 = vmatpush.msra.mxu0 %v142
    %170 = vmatpush.msra.mxu0 %v141
    %171 = vmatpush.msra.mxu0 %v140
    %172 = vmatpush.msra.mxu0 %v139
    %173 = vmatmul.f32.gmra.mxu0 %v137
    %v174 = vpop.f32.mrf.mxu0
    %v175 = vadd.f32 %v156, %v174
    %176 = vdwg.mxu0
    %177 = vst [vmem:[#allocation8] sm:$0xff] %v175
    // Predicated region
    $region26: #{tpu_custom_call.1} parent=1 // pred_check
      _
    $region27: #{tpu_custom_call.1} parent=1 // pred_check_branch
      %179 = sbr.rel (0) target = $region29
    $region28: #{tpu_custom_call.1} parent=1 // pred_region
      %181 = vsyncadd [#allocation4], 0
      %s183 = sshll.u32 [#allocation8], 4
      %s184 = int_to_ptr.vmem [resolvable:$true] %s183
      %s185 = sshll.u32 %s3, 4
      %s186 = int_to_ptr.hbm [resolvable:$true] %s185
      %188 = dma.vmem_to_hbm [thread:$0]  %s184, 128, %s186, [#allocation4]
    $region29: #{tpu_custom_call.1} parent=1 // pred_fallthru
      _
    // Predicated region
    $region30: #{tpu_custom_call.1} parent=1 // pred_check
      _
    $region31: #{tpu_custom_call.1} parent=1 // pred_check_branch
      %190 = sbr.rel (0) target = $region33
    $region32: #{tpu_custom_call.1} parent=1 // pred_region
      %192 = dma.done [#allocation4], 128
    $region33: #{tpu_custom_call.1} parent=1 // pred_fallthru
      _
    %193 = vsyncpa [#allocation3], 1
    %194 = vsyncpa [#allocation6], 1
    %195 = vsyncpa [#allocation4], 1

</llo_original>
